<compile_context>
chip_gen: v6e
topology: v6e:2x2x1
jax: 0.10.0
libtpu: 0.0.40
codegen_flags: <defaults>
</compile_context>

<pallas_src>
import jax
import jax.numpy as jnp
from jax.experimental import pallas as pl
from jax.experimental.pallas import tpu as pltpu

_IN, _H1, _H2, _OUT = 28 * 28, 128, 64, 10
_H2_PAD = 128           # lane-dense padded hidden width
_OUT_PAD = 128          # lane-dense padded logits width


def _round_up(n, m):
    return ((n + m - 1) // m) * m


def _tile_config():
    """(batch-tile cap, vmem_limit_bytes) per TPU generation; safe fallback."""
    try:
        kind = jax.devices()[0].device_kind.lower()
    except Exception:
        kind = ""
    if ("v6" in kind) or ("v7" in kind):
        # ~17 MB working set at TB=2048 with an f32 x tile -- inside the
        # 32 MiB scoped-VMEM default on v6e and v7x (64 MiB physical).
        return 2048, 32 * 1024 * 1024
    # v5e (16 MiB scoped default) and anything unknown: stay conservative.
    return 1024, None


def _mlp_kernel(x_ref, w1_ref, b1_ref, w2_ref, b2_ref, w3_ref, b3_ref, o_ref):
    # x arrives as f32 straight from HBM; cast to bf16 on the VPU (free slot)
    # so the MXU runs the native bf16 path with f32 accumulation.
    x = x_ref[...].astype(jnp.bfloat16)                                 # (TB, 784)
    h1 = jnp.dot(x, w1_ref[...], preferred_element_type=jnp.float32)    # (TB, 128)
    h1 = jnp.maximum(h1 + b1_ref[...], 0.0)
    h2 = jnp.dot(h1.astype(jnp.bfloat16), w2_ref[...],
                 preferred_element_type=jnp.float32)                    # (TB, 128) lane-dense
    h2 = jnp.maximum(h2 + b2_ref[...], 0.0)
    o_ref[...] = jnp.dot(h2.astype(jnp.bfloat16), w3_ref[...],
                         preferred_element_type=jnp.float32) + b3_ref[...]  # (TB, 128)


def prepare_params(params):
    """One-time conversion of f32 [in, out]-layout params into kernel params.

    Casts weights to bf16, keeps biases f32, zero-pads the 64-wide hidden dim
    to 128 and the 10-wide output dim to 128 (exact zeros -> slice is exact).
    Call once and reuse; do NOT call per forward pass."""
    w1, b1, w2, b2, w3, b3 = params
    w1_bf = w1.astype(jnp.bfloat16)                                     # (784, 128)
    b1_f = b1.reshape(1, _H1).astype(jnp.float32)                       # (1, 128)
    w2_bf = jnp.pad(w2.astype(jnp.bfloat16),
                    ((0, 0), (0, _H2_PAD - _H2)))                       # (128, 128)
    b2_f = jnp.pad(b2.reshape(1, _H2).astype(jnp.float32),
                   ((0, 0), (0, _H2_PAD - _H2)))                        # (1, 128)
    w3_bf = jnp.pad(w3.astype(jnp.bfloat16),
                    ((0, _H2_PAD - _H2), (0, _OUT_PAD - _OUT)))         # (128, 128)
    b3_f = jnp.pad(b3.reshape(1, _OUT).astype(jnp.float32),
                   ((0, 0), (0, _OUT_PAD - _OUT)))                      # (1, 128)
    return (w1_bf, b1_f, w2_bf, b2_f, w3_bf, b3_f)


def simple_net_forward(x, kernel_params):
    """x: [..., 1, 28, 28] or [..., 784]. Returns logits [B, 10] in float32."""
    w1_bf, b1_f, w2_bf, b2_f, w3_bf, b3_f = kernel_params

    # Same semantics as torch's x.view(-1, 28*28). No dtype cast, no padding:
    # the kernel reads f32 directly and Pallas masks the partial last tile.
    x2d = x.reshape(-1, _IN)
    B = x2d.shape[0]

    tb_max, vmem_limit = _tile_config()
    # >= 2 grid steps when the batch is big enough (v7x: both TensorCores get
    # work); never bigger than the (sublane-rounded) batch itself.
    TB = min(tb_max, _round_up(pl.cdiv(B, 2), 256))
    TB = max(8, min(TB, _round_up(B, 8)))
    grid = (pl.cdiv(B, TB),)

    cp_kwargs = dict(dimension_semantics=("parallel",))  # batch axis -> 2-TC split on v7x
    if vmem_limit is not None:
        cp_kwargs["vmem_limit_bytes"] = vmem_limit

    resident = lambda shape: pl.BlockSpec(shape, lambda i: (0, 0))

    out = pl.pallas_call(
        _mlp_kernel,
        out_shape=jax.ShapeDtypeStruct((B, _OUT_PAD), jnp.float32),
        grid_spec=pl.GridSpec(
            grid=grid,
            in_specs=[
                # x: tiled over batch, auto double-buffered; partial last tile
                # is masked by Pallas (rows are independent).
                # TODO(synk): if xprof shows exposed DMA on x, try
                # pipeline_mode=pl.Buffered(3) here.
                pl.BlockSpec((TB, _IN), lambda i: (i, 0)),
                resident(w1_bf.shape), resident(b1_f.shape),   # weights: DMA'd once,
                resident(w2_bf.shape), resident(b2_f.shape),   # resident in VMEM
                resident(w3_bf.shape), resident(b3_f.shape),
            ],
            out_specs=pl.BlockSpec((TB, _OUT_PAD), lambda i: (i, 0)),
        ),
        compiler_params=pltpu.CompilerParams(**cp_kwargs),
    )(x2d, w1_bf, b1_f, w2_bf, b2_f, w3_bf, b3_f)

    return out[:, :_OUT]


def init_params(key):
    """Deterministic init matching nn.Linear's default U(-1/sqrt(in), 1/sqrt(in)).

    Weights are stored as [in_features, out_features] (transposed vs. torch)."""
    dims = [(_IN, _H1), (_H1, _H2), (_H2, _OUT)]
    params = []
    for fan_in, fan_out in dims:
        key, kw, kb = jax.random.split(key, 3)
        bound = 1.0 / (fan_in ** 0.5)
        w = jax.random.uniform(kw, (fan_in, fan_out), jnp.float32, -bound, bound)
        b = jax.random.uniform(kb, (1, fan_out), jnp.float32, -bound, bound)
        params.extend([w, b])
    return tuple(params)


def _reference(x, params):
    w1, b1, w2, b2, w3, b3 = params
    xr = x.reshape(-1, _IN)
    h = jnp.maximum(xr @ w1 + b1, 0.0)
    h = jnp.maximum(h @ w2 + b2, 0.0)
    return h @ w3 + b3


if __name__ == "__main__":
    key = jax.random.PRNGKey(0)
    k_params, k_x, k_x2 = jax.random.split(key, 3)

    params = init_params(k_params)
    kernel_params = prepare_params(params)   # hoisted: done once, reused below

    # Small MNIST-like batch: [4, 1, 28, 28] (exercises the partial-tile path).
    x = jax.random.normal(k_x, (4, 1, 28, 28), jnp.float32)
    out = jax.block_until_ready(simple_net_forward(x, kernel_params))
    ref = _reference(x, params)
    assert out.shape == (4, _OUT)
    # bf16 matmul inputs with f32 accumulation -> loose tolerance vs f32 ref.
    assert jnp.allclose(out, ref, atol=5e-2, rtol=5e-2)

    # Non-tile-divisible batch: multi-step grid + masked partial last tile.
    x2 = jax.random.normal(k_x2, (300, 1, 28, 28), jnp.float32)
    out2 = jax.block_until_ready(simple_net_forward(x2, kernel_params))
    ref2 = _reference(x2, params)
    assert out2.shape == (300, _OUT)
    assert jnp.allclose(out2, ref2, atol=5e-2, rtol=5e-2)

    print("KERNEL_OK")
</pallas_src>

<mosaic_0001>
module attributes {stable_mosaic.version = 11 : i64} {
  func.func @_mlp_kernel(%arg0: i32, %arg1: memref<8x784xf32, #tpu.memory_space<vmem>>, %arg2: memref<784x128xbf16, #tpu.memory_space<vmem>>, %arg3: memref<1x128xf32, #tpu.memory_space<vmem>>, %arg4: memref<128x128xbf16, #tpu.memory_space<vmem>>, %arg5: memref<1x128xf32, #tpu.memory_space<vmem>>, %arg6: memref<128x128xbf16, #tpu.memory_space<vmem>>, %arg7: memref<1x128xf32, #tpu.memory_space<vmem>>, %arg8: memref<8x128xf32, #tpu.memory_space<vmem>>) attributes {dimension_semantics = [#tpu.dimension_semantics<parallel>], iteration_bounds = array<i64: 1>, scalar_prefetch = 0 : i64, scratch_operands = 0 : i64, tpu.core_type = #tpu.core_type<tc>, window_params = [{transform_indices = @transform_0, window_bounds = array<i64: 8, 784>}, {pipeline_mode = #tpu.pipeline_mode<synchronous>, transform_indices = @transform_1, window_bounds = array<i64: 784, 128>}, {pipeline_mode = #tpu.pipeline_mode<synchronous>, transform_indices = @transform_2, window_bounds = array<i64: 1, 128>}, {pipeline_mode = #tpu.pipeline_mode<synchronous>, transform_indices = @transform_3, window_bounds = array<i64: 128, 128>}, {pipeline_mode = #tpu.pipeline_mode<synchronous>, transform_indices = @transform_4, window_bounds = array<i64: 1, 128>}, {pipeline_mode = #tpu.pipeline_mode<synchronous>, transform_indices = @transform_5, window_bounds = array<i64: 128, 128>}, {pipeline_mode = #tpu.pipeline_mode<synchronous>, transform_indices = @transform_6, window_bounds = array<i64: 1, 128>}, {transform_indices = @transform_7, window_bounds = array<i64: 8, 128>}]} {
    %c0 = arith.constant 0 : index
    %c0_0 = arith.constant 0 : index
    %0 = vector.load %arg1[%c0, %c0_0] : memref<8x784xf32, #tpu.memory_space<vmem>>, vector<8x784xf32>
    %1 = arith.truncf %0 : vector<8x784xf32> to vector<8x784xbf16>
    %c0_1 = arith.constant 0 : index
    %c0_2 = arith.constant 0 : index
    %2 = vector.load %arg2[%c0_1, %c0_2] : memref<784x128xbf16, #tpu.memory_space<vmem>>, vector<784x128xbf16>
    %cst = arith.constant dense<0.000000e+00> : vector<8x128xf32>
    %3 = tpu.matmul %1, %2, %cst {dimension_numbers = #tpu.dot_dimension_numbers<[1], [0], [0], [1], [0, 0, 1, 1], [], []>} : vector<8x784xbf16>, vector<784x128xbf16>, vector<8x128xf32> -> vector<8x128xf32>
    %c0_3 = arith.constant 0 : index
    %c0_4 = arith.constant 0 : index
    %4 = vector.load %arg3[%c0_3, %c0_4] : memref<1x128xf32, #tpu.memory_space<vmem>>, vector<1x128xf32>
    %5 = vector.broadcast %4 : vector<1x128xf32> to vector<8x128xf32>
    %6 = arith.addf %3, %5 : vector<8x128xf32>
    %cst_5 = arith.constant 0.000000e+00 : f32
    %7 = vector.broadcast %cst_5 : f32 to vector<8x128xf32>
    %8 = arith.maximumf %6, %7 : vector<8x128xf32>
    %9 = arith.truncf %8 : vector<8x128xf32> to vector<8x128xbf16>
    %c0_6 = arith.constant 0 : index
    %c0_7 = arith.constant 0 : index
    %10 = vector.load %arg4[%c0_6, %c0_7] : memref<128x128xbf16, #tpu.memory_space<vmem>>, vector<128x128xbf16>
    %cst_8 = arith.constant dense<0.000000e+00> : vector<8x128xf32>
    %11 = tpu.matmul %9, %10, %cst_8 {dimension_numbers = #tpu.dot_dimension_numbers<[1], [0], [0], [1], [0, 0, 1, 1], [], []>} : vector<8x128xbf16>, vector<128x128xbf16>, vector<8x128xf32> -> vector<8x128xf32>
    %c0_9 = arith.constant 0 : index
    %c0_10 = arith.constant 0 : index
    %12 = vector.load %arg5[%c0_9, %c0_10] : memref<1x128xf32, #tpu.memory_space<vmem>>, vector<1x128xf32>
    %13 = vector.broadcast %12 : vector<1x128xf32> to vector<8x128xf32>
    %14 = arith.addf %11, %13 : vector<8x128xf32>
    %cst_11 = arith.constant 0.000000e+00 : f32
    %15 = vector.broadcast %cst_11 : f32 to vector<8x128xf32>
    %16 = arith.maximumf %14, %15 : vector<8x128xf32>
    %17 = arith.truncf %16 : vector<8x128xf32> to vector<8x128xbf16>
    %c0_12 = arith.constant 0 : index
    %c0_13 = arith.constant 0 : index
    %18 = vector.load %arg6[%c0_12, %c0_13] : memref<128x128xbf16, #tpu.memory_space<vmem>>, vector<128x128xbf16>
    %cst_14 = arith.constant dense<0.000000e+00> : vector<8x128xf32>
    %19 = tpu.matmul %17, %18, %cst_14 {dimension_numbers = #tpu.dot_dimension_numbers<[1], [0], [0], [1], [0, 0, 1, 1], [], []>} : vector<8x128xbf16>, vector<128x128xbf16>, vector<8x128xf32> -> vector<8x128xf32>
    %c0_15 = arith.constant 0 : index
    %c0_16 = arith.constant 0 : index
    %20 = vector.load %arg7[%c0_15, %c0_16] : memref<1x128xf32, #tpu.memory_space<vmem>>, vector<1x128xf32>
    %21 = vector.broadcast %20 : vector<1x128xf32> to vector<8x128xf32>
    %22 = arith.addf %19, %21 : vector<8x128xf32>
    %c0_17 = arith.constant 0 : index
    %c0_18 = arith.constant 0 : index
    %23 = vector.load %arg8[%c0_17, %c0_18] : memref<8x128xf32, #tpu.memory_space<vmem>>, vector<8x128xf32>
    tpu.vector_store %arg8[%c0_17, %c0_18], %22 {strides = array<i32>} : memref<8x128xf32, #tpu.memory_space<vmem>>, vector<8x128xf32>,
    return
  }
  func.func @transform_0(%arg0: i32) -> (i32, i32) {
    %c0_i32 = arith.constant 0 : i32
    %c0_i32_0 = arith.constant 0 : i32
    return %arg0, %c0_i32 : i32, i32
  }
  func.func @transform_1(%arg0: i32) -> (i32, i32) {
    %c0_i32 = arith.constant 0 : i32
    %c0_i32_0 = arith.constant 0 : i32
    %c0_i32_1 = arith.constant 0 : i32
    return %c0_i32, %c0_i32_0 : i32, i32
  }
  func.func @transform_2(%arg0: i32) -> (i32, i32) {
    %c0_i32 = arith.constant 0 : i32
    %c0_i32_0 = arith.constant 0 : i32
    %c0_i32_1 = arith.constant 0 : i32
    return %c0_i32, %c0_i32_0 : i32, i32
  }
  func.func @transform_3(%arg0: i32) -> (i32, i32) {
    %c0_i32 = arith.constant 0 : i32
    %c0_i32_0 = arith.constant 0 : i32
    %c0_i32_1 = arith.constant 0 : i32
    return %c0_i32, %c0_i32_0 : i32, i32
  }
  func.func @transform_4(%arg0: i32) -> (i32, i32) {
    %c0_i32 = arith.constant 0 : i32
    %c0_i32_0 = arith.constant 0 : i32
    %c0_i32_1 = arith.constant 0 : i32
    return %c0_i32, %c0_i32_0 : i32, i32
  }
  func.func @transform_5(%arg0: i32) -> (i32, i32) {
    %c0_i32 = arith.constant 0 : i32
    %c0_i32_0 = arith.constant 0 : i32
    %c0_i32_1 = arith.constant 0 : i32
    return %c0_i32, %c0_i32_0 : i32, i32
  }
  func.func @transform_6(%arg0: i32) -> (i32, i32) {
    %c0_i32 = arith.constant 0 : i32
    %c0_i32_0 = arith.constant 0 : i32
    %c0_i32_1 = arith.constant 0 : i32
    return %c0_i32, %c0_i32_0 : i32, i32
  }
  func.func @transform_7(%arg0: i32) -> (i32, i32) {
    %c0_i32 = arith.constant 0 : i32
    %c0_i32_0 = arith.constant 0 : i32
    return %arg0, %c0_i32 : i32, i32
  }
}

</mosaic_0001>

<llo_original>
// kernel: tpu_custom_call.1
$region0: #{tpu_custom_call.1}
  #allocation0 [shape = 'u32[]', space=smem, size = 0x4, offset = 0x4, fixed_abs, tag = 'smem constant byte address 0x4 - core index']
  #allocation1 [shape = 'u32[144,128]{1,0:T(1,128)}', space=vmem, size = 0x12000, scoped, tag = 'internal scratch']
  %s0 = inlined_call_operand.hbm [shape: f32[4,784], index: 0, kind: input, shape index: {}]
  %s1 = inlined_call_operand.hbm [shape: bf16[784,128], index: 1, kind: input, shape index: {}]
  %s2 = inlined_call_operand.vmem [shape: f32[1,128], index: 2, kind: input, shape index: {}]
  %s3 = inlined_call_operand.hbm [shape: bf16[128,128], index: 3, kind: input, shape index: {}]
  %s4 = inlined_call_operand.vmem [shape: f32[1,128], index: 4, kind: input, shape index: {}]
  %s5 = inlined_call_operand.hbm [shape: bf16[128,128], index: 5, kind: input, shape index: {}]
  %s6 = inlined_call_operand.vmem [shape: f32[1,128], index: 6, kind: input, shape index: {}]
  %s7 = inlined_call_operand.hbm [shape: f32[4,128], index: 7, kind: output, shape index: {}]
  %s8 = sld [smem:[#allocation0]]
  $region54: #{tpu_custom_call.1} parent=0
    _
  %s10 = ssub.s32 1, %s8
  %s11 = scalar_select 0, %s10, %s8
  $region1: #{tpu_custom_call.1} parent=0
    #allocation2 [shape = 'u8[28672]{0}', space=vmem, size = 0x7000, scoped, tag = 'input window, operand 0, single buffered']
    #allocation3 [shape = 's32[1]{0}', space=sflag, size = 0x4, scoped, tag = 'scoped memory for tpu_custom_call.1']
    #allocation4 [shape = 's32[1]{0}', space=sflag, size = 0x4, scoped, tag = 'scoped memory for tpu_custom_call.1']
    #allocation5 [shape = 'u8[200704]{0}', space=vmem, size = 0x31000, scoped, tag = 'input window, operand 1, single buffered']
    #allocation6 [shape = 's32[1]{0}', space=sflag, size = 0x4, scoped, tag = 'scoped memory for tpu_custom_call.1']
    #allocation7 [shape = 'u8[32768]{0}', space=vmem, size = 0x8000, scoped, tag = 'input window, operand 3, single buffered']
    #allocation8 [shape = 'u8[32768]{0}', space=vmem, size = 0x8000, scoped, tag = 'input window, operand 5, single buffered']
    #allocation9 [shape = 's32[1]{0}', space=sflag, size = 0x4, scoped, tag = 'scoped memory for tpu_custom_call.1']
    #allocation10 [shape = 'u8[4096]{0}', space=vmem, size = 0x1000, scoped, tag = 'output window, operand 0, single buffered']
    %12 = vsyncpa [#allocation3], 0
    %13 = vsyncpa [#allocation6], 0
    %14 = vsyncpa [#allocation9], 0
    %15 = vsyncpa [#allocation4], 0
    // Predicated region
    $region2: #{tpu_custom_call.1} parent=1 // pred_check
      _
    $region3: #{tpu_custom_call.1} parent=1 // pred_check_branch
      %17 = sbr.rel (0) target = $region5
    $region4: #{tpu_custom_call.1} parent=1 // pred_region
      %s19 = ssub.s32 896, 448
      %20 = vsyncadd [#allocation3], %s19
      %s21 = sshll.u32 [#allocation2], 4
      %s22 = int_to_ptr.vmem [resolvable:$true] %s21
      %27 = dma.hbm_to_vmem [thread:$0]  %s0, 448, %s22, [#allocation3], 448, 448, 28
    $region5: #{tpu_custom_call.1} parent=1 // pred_fallthru
      _
    // Predicated region
    $region6: #{tpu_custom_call.1} parent=1 // pred_check
      _
    $region7: #{tpu_custom_call.1} parent=1 // pred_check_branch
      %29 = sbr.rel (0) target = $region9
    $region8: #{tpu_custom_call.1} parent=1 // pred_region
      %s31 = ssub.s32 6272, 6272
      %32 = vsyncadd [#allocation6], %s31
      %s33 = sshll.u32 [#allocation5], 4
      %s34 = int_to_ptr.vmem [resolvable:$true] %s33
      %39 = dma.hbm_to_vmem [thread:$0]  %s1, 6272, %s34, [#allocation6], 64, 64, 4
    $region9: #{tpu_custom_call.1} parent=1 // pred_fallthru
      _
    // Predicated region
    $region10: #{tpu_custom_call.1} parent=1 // pred_check
      _
    $region11: #{tpu_custom_call.1} parent=1 // pred_check_branch
      %41 = sbr.rel (0) target = $region13
    $region12: #{tpu_custom_call.1} parent=1 // pred_region
      _
    $region13: #{tpu_custom_call.1} parent=1 // pred_fallthru
      _
    // Predicated region
    $region14: #{tpu_custom_call.1} parent=1 // pred_check
      _
    $region15: #{tpu_custom_call.1} parent=1 // pred_check_branch
      %43 = sbr.rel (0) target = $region17
    $region16: #{tpu_custom_call.1} parent=1 // pred_region
      %s45 = ssub.s32 1024, 1024
      %46 = vsyncadd [#allocation6], %s45
      %s47 = sshll.u32 [#allocation7], 4
      %s48 = int_to_ptr.vmem [resolvable:$true] %s47
      %53 = dma.hbm_to_vmem [thread:$0]  %s3, 1024, %s48, [#allocation6], 64, 64, 4
    $region17: #{tpu_custom_call.1} parent=1 // pred_fallthru
      _
    // Predicated region
    $region18: #{tpu_custom_call.1} parent=1 // pred_check
      _
    $region19: #{tpu_custom_call.1} parent=1 // pred_check_branch
      %55 = sbr.rel (0) target = $region21
    $region20: #{tpu_custom_call.1} parent=1 // pred_region
      _
    $region21: #{tpu_custom_call.1} parent=1 // pred_fallthru
      _
    // Predicated region
    $region22: #{tpu_custom_call.1} parent=1 // pred_check
      _
    $region23: #{tpu_custom_call.1} parent=1 // pred_check_branch
      %57 = sbr.rel (0) target = $region25
    $region24: #{tpu_custom_call.1} parent=1 // pred_region
      %s59 = ssub.s32 1024, 1024
      %60 = vsyncadd [#allocation9], %s59
      %s61 = sshll.u32 [#allocation8], 4
      %s62 = int_to_ptr.vmem [resolvable:$true] %s61
      %67 = dma.hbm_to_vmem [thread:$0]  %s5, 1024, %s62, [#allocation9], 64, 64, 4
    $region25: #{tpu_custom_call.1} parent=1 // pred_fallthru
      _
    // Predicated region
    $region26: #{tpu_custom_call.1} parent=1 // pred_check
      _
    $region27: #{tpu_custom_call.1} parent=1 // pred_check_branch
      %69 = sbr.rel (0) target = $region29
    $region28: #{tpu_custom_call.1} parent=1 // pred_region
      _
    $region29: #{tpu_custom_call.1} parent=1 // pred_fallthru
      _
    // Predicated region
    $region30: #{tpu_custom_call.1} parent=1 // pred_check
      _
    $region31: #{tpu_custom_call.1} parent=1 // pred_check_branch
      %71 = sbr.rel (0) target = $region33
    $region32: #{tpu_custom_call.1} parent=1 // pred_region
      %72 = dma.done [#allocation3], 896
    $region33: #{tpu_custom_call.1} parent=1 // pred_fallthru
      _
    // Predicated region
    $region34: #{tpu_custom_call.1} parent=1 // pred_check
      _
    $region35: #{tpu_custom_call.1} parent=1 // pred_check_branch
      %74 = sbr.rel (0) target = $region37
    $region36: #{tpu_custom_call.1} parent=1 // pred_region
      %75 = dma.done [#allocation6], 6272
    $region37: #{tpu_custom_call.1} parent=1 // pred_fallthru
      _
    // Predicated region
    $region38: #{tpu_custom_call.1} parent=1 // pred_check
      _
    $region39: #{tpu_custom_call.1} parent=1 // pred_check_branch
      %77 = sbr.rel (0) target = $region41
    $region40: #{tpu_custom_call.1} parent=1 // pred_region
      %78 = dma.done [#allocation6], 1024
    $region41: #{tpu_custom_call.1} parent=1 // pred_fallthru
      _
    // Predicated region
    $region42: #{tpu_custom_call.1} parent=1 // pred_check
      _
    $region43: #{tpu_custom_call.1} parent=1 // pred_check_branch
      %80 = sbr.rel (0) target = $region45
    $region44: #{tpu_custom_call.1} parent=1 // pred_region
      %81 = dma.done [#allocation9], 1024
    $region45: #{tpu_custom_call.1} parent=1 // pred_fallthru
      _
    %v83 = vld [vmem:[#allocation2] sm:$0xff]
    %v84 = vld [vmem:[#allocation2 + $0x8] sm:$0xff]
    %v85 = vld [vmem:[#allocation2 + $0x10] sm:$0xff]
    %v86 = vld [vmem:[#allocation2 + $0x18] sm:$0xf]
    %v87 = vld [vmem:[#allocation2 + $0x1c] sm:$0xff]
    %v88 = vld [vmem:[#allocation2 + $0x24] sm:$0xff]
    %v89 = vld [vmem:[#allocation2 + $0x2c] sm:$0xff]
    %v90 = vld [vmem:[#allocation2 + $0x34] sm:$0xf]
    %v99 = vcombine.low %v83, %v87
    %v100 = vcombine.high %v83, %v87
    %v101 = vcombine.low %v84, %v88
    %v102 = vcombine.high %v84, %v88
    %v103 = vcombine.low %v85, %v89
    %v104 = vcombine.high %v85, %v89
    %v105 = vcombine.low %v86, %v90
    %v113 = vpack.c.bf16 %v99, %v99
    %v114 = vpack.c.bf16 %v100, %v100
    %v115 = vpack.c.bf16 %v101, %v101
    %v116 = vpack.c.bf16 %v102, %v102
    %v117 = vpack.c.bf16 %v103, %v103
    %v118 = vpack.c.bf16 %v104, %v104
    %v119 = vpack.c.bf16 %v105, %v105
    %v120 = vld [vmem:[#allocation5] sm:$0xf]
    %v121 = vld [vmem:[#allocation5 + $0x4] sm:$0xf]
    %v122 = vld [vmem:[#allocation5 + $0x8] sm:$0xf]
    %v123 = vld [vmem:[#allocation5 + $0xc] sm:$0xf]
    %v124 = vld [vmem:[#allocation5 + $0x10] sm:$0xf]
    %v125 = vld [vmem:[#allocation5 + $0x14] sm:$0xf]
    %v126 = vld [vmem:[#allocation5 + $0x18] sm:$0xf]
    %v127 = vld [vmem:[#allocation5 + $0x1c] sm:$0xf]
    %v128 = vld [vmem:[#allocation5 + $0x20] sm:$0xf]
    %v129 = vld [vmem:[#allocation5 + $0x24] sm:$0xf]
    %v130 = vld [vmem:[#allocation5 + $0x28] sm:$0xf]
    %v131 = vld [vmem:[#allocation5 + $0x2c] sm:$0xf]
    %v132 = vld [vmem:[#allocation5 + $0x30] sm:$0xf]
    %v133 = vld [vmem:[#allocation5 + $0x34] sm:$0xf]
    %v134 = vld [vmem:[#allocation5 + $0x38] sm:$0xf]
    %v135 = vld [vmem:[#allocation5 + $0x3c] sm:$0xf]
    %v136 = vld [vmem:[#allocation5 + $0x40] sm:$0xf]
    %v137 = vld [vmem:[#allocation5 + $0x44] sm:$0xf]
    %v138 = vld [vmem:[#allocation5 + $0x48] sm:$0xf]
    %v139 = vld [vmem:[#allocation5 + $0x4c] sm:$0xf]
    %v140 = vld [vmem:[#allocation5 + $0x50] sm:$0xf]
    %v141 = vld [vmem:[#allocation5 + $0x54] sm:$0xf]
    %v142 = vld [vmem:[#allocation5 + $0x58] sm:$0xf]
    %v143 = vld [vmem:[#allocation5 + $0x5c] sm:$0xf]
    %v144 = vld [vmem:[#allocation5 + $0x60] sm:$0xf]
    %v145 = vld [vmem:[#allocation5 + $0x64] sm:$0xf]
    %v146 = vld [vmem:[#allocation5 + $0x68] sm:$0xf]
    %v147 = vld [vmem:[#allocation5 + $0x6c] sm:$0xf]
    %v148 = vld [vmem:[#allocation5 + $0x70] sm:$0xf]
    %v149 = vld [vmem:[#allocation5 + $0x74] sm:$0xf]
    %v150 = vld [vmem:[#allocation5 + $0x78] sm:$0xf]
    %v151 = vld [vmem:[#allocation5 + $0x7c] sm:$0xf]
    %v152 = vld [vmem:[#allocation5 + $0x80] sm:$0xf]
    %v153 = vld [vmem:[#allocation5 + $0x84] sm:$0xf]
    %v154 = vld [vmem:[#allocation5 + $0x88] sm:$0xf]
    %v155 = vld [vmem:[#allocation5 + $0x8c] sm:$0xf]
    %v156 = vld [vmem:[#allocation5 + $0x90] sm:$0xf]
    %v157 = vld [vmem:[#allocation5 + $0x94] sm:$0xf]
    %v158 = vld [vmem:[#allocation5 + $0x98] sm:$0xf]
    %v159 = vld [vmem:[#allocation5 + $0x9c] sm:$0xf]
    %v160 = vld [vmem:[#allocation5 + $0xa0] sm:$0xf]
    %v161 = vld [vmem:[#allocation5 + $0xa4] sm:$0xf]
    %v162 = vld [vmem:[#allocation5 + $0xa8] sm:$0xf]
    %v163 = vld [vmem:[#allocation5 + $0xac] sm:$0xf]
    %v164 = vld [vmem:[#allocation5 + $0xb0] sm:$0xf]
    %v165 = vld [vmem:[#allocation5 + $0xb4] sm:$0xf]
    %v166 = vld [vmem:[#allocation5 + $0xb8] sm:$0xf]
    %v167 = vld [vmem:[#allocation5 + $0xbc] sm:$0xf]
    %v168 = vld [vmem:[#allocation5 + $0xc0] sm:$0xf]
    %v169 = vld [vmem:[#allocation5 + $0xc4] sm:$0xf]
    %v170 = vld [vmem:[#allocation5 + $0xc8] sm:$0xf]
    %v171 = vld [vmem:[#allocation5 + $0xcc] sm:$0xf]
    %v172 = vld [vmem:[#allocation5 + $0xd0] sm:$0xf]
    %v173 = vld [vmem:[#allocation5 + $0xd4] sm:$0xf]
    %v174 = vld [vmem:[#allocation5 + $0xd8] sm:$0xf]
    %v175 = vld [vmem:[#allocation5 + $0xdc] sm:$0xf]
    %v176 = vld [vmem:[#allocation5 + $0xe0] sm:$0xf]
    %v177 = vld [vmem:[#allocation5 + $0xe4] sm:$0xf]
    %v178 = vld [vmem:[#allocation5 + $0xe8] sm:$0xf]
    %v179 = vld [vmem:[#allocation5 + $0xec] sm:$0xf]
    %v180 = vld [vmem:[#allocation5 + $0xf0] sm:$0xf]
    %v181 = vld [vmem:[#allocation5 + $0xf4] sm:$0xf]
    %v182 = vld [vmem:[#allocation5 + $0xf8] sm:$0xf]
    %v183 = vld [vmem:[#allocation5 + $0xfc] sm:$0xf]
    %v184 = vld [vmem:[#allocation5 + $0x100] sm:$0xf]
    %v185 = vld [vmem:[#allocation5 + $0x104] sm:$0xf]
    %v186 = vld [vmem:[#allocation5 + $0x108] sm:$0xf]
    %v187 = vld [vmem:[#allocation5 + $0x10c] sm:$0xf]
    %v188 = vld [vmem:[#allocation5 + $0x110] sm:$0xf]
    %v189 = vld [vmem:[#allocation5 + $0x114] sm:$0xf]
    %v190 = vld [vmem:[#allocation5 + $0x118] sm:$0xf]
    %v191 = vld [vmem:[#allocation5 + $0x11c] sm:$0xf]
    %v192 = vld [vmem:[#allocation5 + $0x120] sm:$0xf]
    %v193 = vld [vmem:[#allocation5 + $0x124] sm:$0xf]
    %v194 = vld [vmem:[#allocation5 + $0x128] sm:$0xf]
    %v195 = vld [vmem:[#allocation5 + $0x12c] sm:$0xf]
    %v196 = vld [vmem:[#allocation5 + $0x130] sm:$0xf]
    %v197 = vld [vmem:[#allocation5 + $0x134] sm:$0xf]
    %v198 = vld [vmem:[#allocation5 + $0x138] sm:$0xf]
    %v199 = vld [vmem:[#allocation5 + $0x13c] sm:$0xf]
    %v200 = vld [vmem:[#allocation5 + $0x140] sm:$0xf]
    %v201 = vld [vmem:[#allocation5 + $0x144] sm:$0xf]
    %v202 = vld [vmem:[#allocation5 + $0x148] sm:$0xf]
    %v203 = vld [vmem:[#allocation5 + $0x14c] sm:$0xf]
    %v204 = vld [vmem:[#allocation5 + $0x150] sm:$0xf]
    %v205 = vld [vmem:[#allocation5 + $0x154] sm:$0xf]
    %v206 = vld [vmem:[#allocation5 + $0x158] sm:$0xf]
    %v207 = vld [vmem:[#allocation5 + $0x15c] sm:$0xf]
    %v208 = vld [vmem:[#allocation5 + $0x160] sm:$0xf]
    %v209 = vld [vmem:[#allocation5 + $0x164] sm:$0xf]
    %v210 = vld [vmem:[#allocation5 + $0x168] sm:$0xf]
    %v211 = vld [vmem:[#allocation5 + $0x16c] sm:$0xf]
    %v212 = vld [vmem:[#allocation5 + $0x170] sm:$0xf]
    %v213 = vld [vmem:[#allocation5 + $0x174] sm:$0xf]
    %v214 = vld [vmem:[#allocation5 + $0x178] sm:$0xf]
    %v215 = vld [vmem:[#allocation5 + $0x17c] sm:$0xf]
    %v216 = vld [vmem:[#allocation5 + $0x180] sm:$0xf]
    %v217 = vld [vmem:[#allocation5 + $0x184] sm:$0xf]
    %v218 = vld [vmem:[%s2] sm:$0x1]
    %v220 = vlaneseq
    %v221 = vshrl.u32 %v220, 7
    %v222 = vsub.s32 0, %v221
    %v223 = vrot.slane %v218, %v222
    %v323 = vunpack.c.l.b16 %v120
    %v324 = vunpack.c.l.b16 %v121
    %v325 = vunpack.c.l.b16 %v122
    %v326 = vunpack.c.l.b16 %v123
    %v327 = vunpack.c.l.b16 %v124
    %v328 = vunpack.c.l.b16 %v125
    %v329 = vunpack.c.l.b16 %v126
    %v330 = vunpack.c.l.b16 %v127
    %v331 = vunpack.c.l.b16 %v128
    %v332 = vunpack.c.l.b16 %v129
    %v333 = vunpack.c.l.b16 %v130
    %v334 = vunpack.c.l.b16 %v131
    %v335 = vunpack.c.l.b16 %v132
    %v336 = vunpack.c.l.b16 %v133
    %v337 = vunpack.c.l.b16 %v134
    %v338 = vunpack.c.l.b16 %v135
    %v339 = vunpack.c.l.b16 %v136
    %v340 = vunpack.c.l.b16 %v137
    %v341 = vunpack.c.l.b16 %v138
    %v342 = vunpack.c.l.b16 %v139
    %v343 = vunpack.c.l.b16 %v140
    %v344 = vunpack.c.l.b16 %v141
    %v345 = vunpack.c.l.b16 %v142
    %v346 = vunpack.c.l.b16 %v143
    %v347 = vunpack.c.l.b16 %v144
    %v348 = vunpack.c.l.b16 %v145
    %v349 = vunpack.c.l.b16 %v146
    %v350 = vunpack.c.l.b16 %v147
    %v351 = vunpack.c.l.b16 %v148
    %v352 = vunpack.c.l.b16 %v149
    %v353 = vunpack.c.l.b16 %v150
    %v354 = vunpack.c.l.b16 %v151
    %v355 = vunpack.c.l.b16 %v152
    %v356 = vunpack.c.l.b16 %v153
    %v357 = vunpack.c.l.b16 %v154
    %v358 = vunpack.c.l.b16 %v155
    %v359 = vunpack.c.l.b16 %v156
    %v360 = vunpack.c.l.b16 %v157
    %v361 = vunpack.c.l.b16 %v158
    %v362 = vunpack.c.l.b16 %v159
    %v363 = vunpack.c.l.b16 %v160
    %v364 = vunpack.c.l.b16 %v161
    %v365 = vunpack.c.l.b16 %v162
    %v366 = vunpack.c.l.b16 %v163
    %v367 = vunpack.c.l.b16 %v164
    %v368 = vunpack.c.l.b16 %v165
    %v369 = vunpack.c.l.b16 %v166
    %v370 = vunpack.c.l.b16 %v167
    %v371 = vunpack.c.l.b16 %v168
    %v372 = vunpack.c.l.b16 %v169
    %v373 = vunpack.c.l.b16 %v170
    %v374 = vunpack.c.l.b16 %v171
    %v375 = vunpack.c.l.b16 %v172
    %v376 = vunpack.c.l.b16 %v173
    %v377 = vunpack.c.l.b16 %v174
    %v378 = vunpack.c.l.b16 %v175
    %v379 = vunpack.c.l.b16 %v176
    %v380 = vunpack.c.l.b16 %v177
    %v381 = vunpack.c.l.b16 %v178
    %v382 = vunpack.c.l.b16 %v179
    %v383 = vunpack.c.l.b16 %v180
    %v384 = vunpack.c.l.b16 %v181
    %v385 = vunpack.c.l.b16 %v182
    %v386 = vunpack.c.l.b16 %v183
    %v387 = vunpack.c.l.b16 %v184
    %v388 = vunpack.c.l.b16 %v185
    %v389 = vunpack.c.l.b16 %v186
    %v390 = vunpack.c.l.b16 %v187
    %v391 = vunpack.c.l.b16 %v188
    %v392 = vunpack.c.l.b16 %v189
    %v393 = vunpack.c.l.b16 %v190
    %v394 = vunpack.c.l.b16 %v191
    %v395 = vunpack.c.l.b16 %v192
    %v396 = vunpack.c.l.b16 %v193
    %v397 = vunpack.c.l.b16 %v194
    %v398 = vunpack.c.l.b16 %v195
    %v399 = vunpack.c.l.b16 %v196
    %v400 = vunpack.c.l.b16 %v197
    %v401 = vunpack.c.l.b16 %v198
    %v402 = vunpack.c.l.b16 %v199
    %v403 = vunpack.c.l.b16 %v200
    %v404 = vunpack.c.l.b16 %v201
    %v405 = vunpack.c.l.b16 %v202
    %v406 = vunpack.c.l.b16 %v203
    %v407 = vunpack.c.l.b16 %v204
    %v408 = vunpack.c.l.b16 %v205
    %v409 = vunpack.c.l.b16 %v206
    %v410 = vunpack.c.l.b16 %v207
    %v411 = vunpack.c.l.b16 %v208
    %v412 = vunpack.c.l.b16 %v209
    %v413 = vunpack.c.l.b16 %v210
    %v414 = vunpack.c.l.b16 %v211
    %v415 = vunpack.c.l.b16 %v212
    %v416 = vunpack.c.l.b16 %v213
    %v417 = vunpack.c.l.b16 %v214
    %v418 = vunpack.c.l.b16 %v215
    %v419 = vunpack.c.l.b16 %v216
    %v420 = vunpack.c.l.b16 %v217
    %v421 = vpack.c.b16 %v324, %v323
    %v422 = vpack.c.b16 %v326, %v325
    %v423 = vpack.c.b16 %v328, %v327
    %v424 = vpack.c.b16 %v330, %v329
    %v425 = vpack.c.b16 %v332, %v331
    %v426 = vpack.c.b16 %v334, %v333
    %v427 = vpack.c.b16 %v336, %v335
    %v428 = vpack.c.b16 %v338, %v337
    %v429 = vpack.c.b16 %v340, %v339
    %v430 = vpack.c.b16 %v342, %v341
    %v431 = vpack.c.b16 %v344, %v343
    %v432 = vpack.c.b16 %v346, %v345
    %v433 = vpack.c.b16 %v348, %v347
    %v434 = vpack.c.b16 %v350, %v349
    %v435 = vpack.c.b16 %v352, %v351
    %v436 = vpack.c.b16 %v354, %v353
    %v437 = vpack.c.b16 %v356, %v355
    %v438 = vpack.c.b16 %v358, %v357
    %v439 = vpack.c.b16 %v360, %v359
    %v440 = vpack.c.b16 %v362, %v361
    %v441 = vpack.c.b16 %v364, %v363
    %v442 = vpack.c.b16 %v366, %v365
    %v443 = vpack.c.b16 %v368, %v367
    %v444 = vpack.c.b16 %v370, %v369
    %v445 = vpack.c.b16 %v372, %v371
    %v446 = vpack.c.b16 %v374, %v373
    %v447 = vpack.c.b16 %v376, %v375
    %v448 = vpack.c.b16 %v378, %v377
    %v449 = vpack.c.b16 %v380, %v379
    %v450 = vpack.c.b16 %v382, %v381
    %v451 = vpack.c.b16 %v384, %v383
    %v452 = vpack.c.b16 %v386, %v385
    %v453 = vpack.c.b16 %v388, %v387
    %v454 = vpack.c.b16 %v390, %v389
    %v455 = vpack.c.b16 %v392, %v391
    %v456 = vpack.c.b16 %v394, %v393
    %v457 = vpack.c.b16 %v396, %v395
    %v458 = vpack.c.b16 %v398, %v397
    %v459 = vpack.c.b16 %v400, %v399
    %v460 = vpack.c.b16 %v402, %v401
    %v461 = vpack.c.b16 %v404, %v403
    %v462 = vpack.c.b16 %v406, %v405
    %v463 = vpack.c.b16 %v408, %v407
    %v464 = vpack.c.b16 %v410, %v409
    %v465 = vpack.c.b16 %v412, %v411
    %v466 = vpack.c.b16 %v414, %v413
    %v467 = vpack.c.b16 %v416, %v415
    %v468 = vpack.c.b16 %v418, %v417
    %v469 = vpack.c.b16 %v420, %v419
    %vm519 = vcmask 130048
    %v521 = vsel %vm519, %v119, 0
    %523 = vmatprep.subr.bf16.mxu0 0
    %524 = vmatpush1.bf16.msra.mxu0 %v428
    %525 = vmatprep.subr.bf16.mxu0 0
    %526 = vmatpush1.bf16.msra.mxu0 %v427
    %527 = vmatprep.subr.bf16.mxu0 0
    %528 = vmatpush1.bf16.msra.mxu0 %v426
    %529 = vmatprep.subr.bf16.mxu0 0
    %530 = vmatpush1.bf16.msra.mxu0 %v425
    %531 = vmatprep.subr.bf16.mxu0 0
    %532 = vmatpush1.bf16.msra.mxu0 %v424
    %533 = vmatprep.subr.bf16.mxu0 0
    %534 = vmatpush1.bf16.msra.mxu0 %v423
    %535 = vmatprep.subr.bf16.mxu0 0
    %536 = vmatpush1.bf16.msra.mxu0 %v422
    %537 = vmatprep.subr.bf16.mxu0 0
    %538 = vmatpush1.bf16.msra.mxu0 %v421
    %539 = vmatprep.subr.bf16.mxu0 0
    %540 = vmatpush2.bf16.msra.mxu0 %v436
    %541 = vmatprep.subr.bf16.mxu0 0
    %542 = vmatpush2.bf16.msra.mxu0 %v435
    %543 = vmatprep.subr.bf16.mxu0 0
    %544 = vmatpush2.bf16.msra.mxu0 %v434
    %545 = vmatprep.subr.bf16.mxu0 0
    %546 = vmatpush2.bf16.msra.mxu0 %v433
    %547 = vmatprep.subr.bf16.mxu0 0
    %548 = vmatpush2.bf16.msra.mxu0 %v432
    %549 = vmatprep.subr.bf16.mxu0 0
    %550 = vmatpush2.bf16.msra.mxu0 %v431
    %551 = vmatprep.subr.bf16.mxu0 0
    %552 = vmatpush2.bf16.msra.mxu0 %v430
    %553 = vmatprep.subr.bf16.mxu0 0
    %554 = vmatpush2.bf16.msra.mxu0 %v429
    %555 = vmatprep.mubr.bf16.mxu0 %v114
    %556 = vmatmul.mubr.bf16.gmra.mxu0 %v113
    %v557 = vpop.f32.mrf.mxu0
    %v558 = vadd.f32 %v223, %v557
    %v559 = vpop.f32.mrf.mxu0
    %v560 = vpop.f32.mrf.mxu0
    %v561 = vpop.f32.mrf.mxu0
    %562 = vdwg.mxu0
    %563 = vmatprep.subr.bf16.mxu0 0
    %564 = vmatpush1.bf16.msra.mxu0 %v444
    %565 = vmatprep.subr.bf16.mxu0 0
    %566 = vmatpush1.bf16.msra.mxu0 %v443
    %567 = vmatprep.subr.bf16.mxu0 0
    %568 = vmatpush1.bf16.msra.mxu0 %v442
    %569 = vmatprep.subr.bf16.mxu0 0
    %570 = vmatpush1.bf16.msra.mxu0 %v441
    %571 = vmatprep.subr.bf16.mxu0 0
    %572 = vmatpush1.bf16.msra.mxu0 %v440
    %573 = vmatprep.subr.bf16.mxu0 0
    %574 = vmatpush1.bf16.msra.mxu0 %v439
    %575 = vmatprep.subr.bf16.mxu0 0
    %576 = vmatpush1.bf16.msra.mxu0 %v438
    %577 = vmatprep.subr.bf16.mxu0 0
    %578 = vmatpush1.bf16.msra.mxu0 %v437
    %579 = vmatprep.subr.bf16.mxu0 0
    %580 = vmatpush2.bf16.msra.mxu0 %v452
    %581 = vmatprep.subr.bf16.mxu0 0
    %582 = vmatpush2.bf16.msra.mxu0 %v451
    %583 = vmatprep.subr.bf16.mxu0 0
    %584 = vmatpush2.bf16.msra.mxu0 %v450
    %585 = vmatprep.subr.bf16.mxu0 0
    %586 = vmatpush2.bf16.msra.mxu0 %v449
    %587 = vmatprep.subr.bf16.mxu0 0
    %588 = vmatpush2.bf16.msra.mxu0 %v448
    %589 = vmatprep.subr.bf16.mxu0 0
    %590 = vmatpush2.bf16.msra.mxu0 %v447
    %591 = vmatprep.subr.bf16.mxu0 0
    %592 = vmatpush2.bf16.msra.mxu0 %v446
    %593 = vmatprep.subr.bf16.mxu0 0
    %594 = vmatpush2.bf16.msra.mxu0 %v445
    %595 = vmatprep.mubr.bf16.mxu0 %v116
    %596 = vmatmul.mubr.bf16.gmra.mxu0 %v115
    %v597 = vpop.f32.mrf.mxu0
    %v598 = vadd.f32 %v558, %v597
    %v599 = vpop.f32.mrf.mxu0
    %v600 = vpop.f32.mrf.mxu0
    %v601 = vpop.f32.mrf.mxu0
    %602 = vdwg.mxu0
    %603 = vmatprep.subr.bf16.mxu0 0
    %604 = vmatpush1.bf16.msra.mxu0 %v460
    %605 = vmatprep.subr.bf16.mxu0 0
    %606 = vmatpush1.bf16.msra.mxu0 %v459
    %607 = vmatprep.subr.bf16.mxu0 0
    %608 = vmatpush1.bf16.msra.mxu0 %v458
    %609 = vmatprep.subr.bf16.mxu0 0
    %610 = vmatpush1.bf16.msra.mxu0 %v457
    %611 = vmatprep.subr.bf16.mxu0 0
    %612 = vmatpush1.bf16.msra.mxu0 %v456
    %613 = vmatprep.subr.bf16.mxu0 0
    %614 = vmatpush1.bf16.msra.mxu0 %v455
    %615 = vmatprep.subr.bf16.mxu0 0
    %616 = vmatpush1.bf16.msra.mxu0 %v454
    %617 = vmatprep.subr.bf16.mxu0 0
    %618 = vmatpush1.bf16.msra.mxu0 %v453
    %619 = vmatprep.subr.bf16.mxu0 0
    %620 = vmatpush2.bf16.msra.mxu0 %v468
    %621 = vmatprep.subr.bf16.mxu0 0
    %622 = vmatpush2.bf16.msra.mxu0 %v467
    %623 = vmatprep.subr.bf16.mxu0 0
    %624 = vmatpush2.bf16.msra.mxu0 %v466
    %625 = vmatprep.subr.bf16.mxu0 0
    %626 = vmatpush2.bf16.msra.mxu0 %v465
    %627 = vmatprep.subr.bf16.mxu0 0
    %628 = vmatpush2.bf16.msra.mxu0 %v464
    %629 = vmatprep.subr.bf16.mxu0 0
    %630 = vmatpush2.bf16.msra.mxu0 %v463
    %631 = vmatprep.subr.bf16.mxu0 0
    %632 = vmatpush2.bf16.msra.mxu0 %v462
    %633 = vmatprep.subr.bf16.mxu0 0
    %634 = vmatpush2.bf16.msra.mxu0 %v461
    %635 = vmatprep.mubr.bf16.mxu0 %v118
    %636 = vmatmul.mubr.bf16.gmra.mxu0 %v117
    %v637 = vpop.f32.mrf.mxu0
    %v638 = vadd.f32 %v598, %v637
    %v639 = vpop.f32.mrf.mxu0
    %v640 = vpop.f32.mrf.mxu0
    %v641 = vpop.f32.mrf.mxu0
    %642 = vdwg.mxu0
    %643 = vmatprep.subr.bf16.mxu0 0
    %644 = vmatpush1.bf16.msra.mxu0 0
    %645 = vmatprep.subr.bf16.mxu0 0
    %646 = vmatpush1.bf16.msra.mxu0 0
    %647 = vmatprep.subr.bf16.mxu0 0
    %648 = vmatpush1.bf16.msra.mxu0 0
    %649 = vmatprep.subr.bf16.mxu0 0
    %650 = vmatpush1.bf16.msra.mxu0 0
    %651 = vmatprep.subr.bf16.mxu0 0
    %652 = vmatpush1.bf16.msra.mxu0 0
    %653 = vmatprep.subr.bf16.mxu0 0
    %654 = vmatpush1.bf16.msra.mxu0 0
    %655 = vmatprep.subr.bf16.mxu0 0
    %656 = vmatpush1.bf16.msra.mxu0 0
    %657 = vmatprep.subr.bf16.mxu0 0
    %658 = vmatpush1.bf16.msra.mxu0 %v469
    %659 = vmatprep.subr.bf16.mxu0 0
    %660 = vmatpush2.bf16.msra.mxu0 0
    %661 = vmatprep.subr.bf16.mxu0 0
    %662 = vmatpush2.bf16.msra.mxu0 0
    %663 = vmatprep.subr.bf16.mxu0 0
    %664 = vmatpush2.bf16.msra.mxu0 0
    %665 = vmatprep.subr.bf16.mxu0 0
    %666 = vmatpush2.bf16.msra.mxu0 0
    %667 = vmatprep.subr.bf16.mxu0 0
    %668 = vmatpush2.bf16.msra.mxu0 0
    %669 = vmatprep.subr.bf16.mxu0 0
    %670 = vmatpush2.bf16.msra.mxu0 0
    %671 = vmatprep.subr.bf16.mxu0 0
    %672 = vmatpush2.bf16.msra.mxu0 0
    %673 = vmatprep.subr.bf16.mxu0 0
    %674 = vmatpush2.bf16.msra.mxu0 0
    %675 = vmatprep.mubr.bf16.mxu0 0
    %676 = vmatmul.mubr.bf16.gmra.mxu0 %v521
    %v677 = vpop.f32.mrf.mxu0
    %v678 = vadd.f32 %v638, %v677
    %v679 = vpop.f32.mrf.mxu0
    %v680 = vpop.f32.mrf.mxu0
    %v681 = vpop.f32.mrf.mxu0
    %682 = vdwg.mxu0
    %v683 = vmax.f32 %v678, 0.0
    %v684 = vpack.c.bf16 %v683, %v683
    %v685 = vld [vmem:[#allocation7] sm:$0xf]
    %v686 = vld [vmem:[#allocation7 + $0x4] sm:$0xf]
    %v687 = vld [vmem:[#allocation7 + $0x8] sm:$0xf]
    %v688 = vld [vmem:[#allocation7 + $0xc] sm:$0xf]
    %v689 = vld [vmem:[#allocation7 + $0x10] sm:$0xf]
    %v690 = vld [vmem:[#allocation7 + $0x14] sm:$0xf]
    %v691 = vld [vmem:[#allocation7 + $0x18] sm:$0xf]
    %v692 = vld [vmem:[#allocation7 + $0x1c] sm:$0xf]
    %v693 = vld [vmem:[#allocation7 + $0x20] sm:$0xf]
    %v694 = vld [vmem:[#allocation7 + $0x24] sm:$0xf]
    %v695 = vld [vmem:[#allocation7 + $0x28] sm:$0xf]
    %v696 = vld [vmem:[#allocation7 + $0x2c] sm:$0xf]
    %v697 = vld [vmem:[#allocation7 + $0x30] sm:$0xf]
    %v698 = vld [vmem:[#allocation7 + $0x34] sm:$0xf]
    %v699 = vld [vmem:[#allocation7 + $0x38] sm:$0xf]
    %v700 = vld [vmem:[#allocation7 + $0x3c] sm:$0xf]
    %v701 = vld [vmem:[%s4] sm:$0x1]
    %v703 = vlaneseq
    %v704 = vshrl.u32 %v703, 7
    %v705 = vsub.s32 0, %v704
    %v706 = vrot.slane %v701, %v705
    %v724 = vunpack.c.l.b16 %v685
    %v725 = vunpack.c.l.b16 %v686
    %v726 = vunpack.c.l.b16 %v687
    %v727 = vunpack.c.l.b16 %v688
    %v728 = vunpack.c.l.b16 %v689
    %v729 = vunpack.c.l.b16 %v690
    %v730 = vunpack.c.l.b16 %v691
    %v731 = vunpack.c.l.b16 %v692
    %v732 = vunpack.c.l.b16 %v693
    %v733 = vunpack.c.l.b16 %v694
    %v734 = vunpack.c.l.b16 %v695
    %v735 = vunpack.c.l.b16 %v696
    %v736 = vunpack.c.l.b16 %v697
    %v737 = vunpack.c.l.b16 %v698
    %v738 = vunpack.c.l.b16 %v699
    %v739 = vunpack.c.l.b16 %v700
    %v740 = vpack.c.b16 %v725, %v724
    %v741 = vpack.c.b16 %v727, %v726
    %v742 = vpack.c.b16 %v729, %v728
    %v743 = vpack.c.b16 %v731, %v730
    %v744 = vpack.c.b16 %v733, %v732
    %v745 = vpack.c.b16 %v735, %v734
    %v746 = vpack.c.b16 %v737, %v736
    %v747 = vpack.c.b16 %v739, %v738
    %756 = vmatprep.subr.bf16.mxu0 0
    %757 = vmatpush1.bf16.msra.mxu0 %v747
    %758 = vmatprep.subr.bf16.mxu0 0
    %759 = vmatpush1.bf16.msra.mxu0 %v746
    %760 = vmatprep.subr.bf16.mxu0 0
    %761 = vmatpush1.bf16.msra.mxu0 %v745
    %762 = vmatprep.subr.bf16.mxu0 0
    %763 = vmatpush1.bf16.msra.mxu0 %v744
    %764 = vmatprep.subr.bf16.mxu0 0
    %765 = vmatpush1.bf16.msra.mxu0 %v743
    %766 = vmatprep.subr.bf16.mxu0 0
    %767 = vmatpush1.bf16.msra.mxu0 %v742
    %768 = vmatprep.subr.bf16.mxu0 0
    %769 = vmatpush1.bf16.msra.mxu0 %v741
    %770 = vmatprep.subr.bf16.mxu0 0
    %771 = vmatpush1.bf16.msra.mxu0 %v740
    %772 = vmatprep.subr.bf16.mxu0 0
    %773 = vmatpush2.bf16.msra.mxu0 0
    %774 = vmatprep.subr.bf16.mxu0 0
    %775 = vmatpush2.bf16.msra.mxu0 0
    %776 = vmatprep.subr.bf16.mxu0 0
    %777 = vmatpush2.bf16.msra.mxu0 0
    %778 = vmatprep.subr.bf16.mxu0 0
    %779 = vmatpush2.bf16.msra.mxu0 0
    %780 = vmatprep.subr.bf16.mxu0 0
    %781 = vmatpush2.bf16.msra.mxu0 0
    %782 = vmatprep.subr.bf16.mxu0 0
    %783 = vmatpush2.bf16.msra.mxu0 0
    %784 = vmatprep.subr.bf16.mxu0 0
    %785 = vmatpush2.bf16.msra.mxu0 0
    %786 = vmatprep.subr.bf16.mxu0 0
    %787 = vmatpush2.bf16.msra.mxu0 0
    %788 = vmatprep.mubr.bf16.mxu0 0
    %789 = vmatmul.mubr.bf16.gmra.mxu0 %v684
    %v790 = vpop.f32.mrf.mxu0
    %v791 = vadd.f32 %v706, %v790
    %v792 = vpop.f32.mrf.mxu0
    %v793 = vpop.f32.mrf.mxu0
    %v794 = vpop.f32.mrf.mxu0
    %795 = vdwg.mxu0
    %v796 = vmax.f32 %v791, 0.0
    %v797 = vpack.c.bf16 %v796, %v796
    %v798 = vld [vmem:[#allocation8] sm:$0xf]
    %v799 = vld [vmem:[#allocation8 + $0x4] sm:$0xf]
    %v800 = vld [vmem:[#allocation8 + $0x8] sm:$0xf]
    %v801 = vld [vmem:[#allocation8 + $0xc] sm:$0xf]
    %v802 = vld [vmem:[#allocation8 + $0x10] sm:$0xf]
    %v803 = vld [vmem:[#allocation8 + $0x14] sm:$0xf]
    %v804 = vld [vmem:[#allocation8 + $0x18] sm:$0xf]
    %v805 = vld [vmem:[#allocation8 + $0x1c] sm:$0xf]
    %v806 = vld [vmem:[#allocation8 + $0x20] sm:$0xf]
    %v807 = vld [vmem:[#allocation8 + $0x24] sm:$0xf]
    %v808 = vld [vmem:[#allocation8 + $0x28] sm:$0xf]
    %v809 = vld [vmem:[#allocation8 + $0x2c] sm:$0xf]
    %v810 = vld [vmem:[#allocation8 + $0x30] sm:$0xf]
    %v811 = vld [vmem:[#allocation8 + $0x34] sm:$0xf]
    %v812 = vld [vmem:[#allocation8 + $0x38] sm:$0xf]
    %v813 = vld [vmem:[#allocation8 + $0x3c] sm:$0xf]
    %v814 = vld [vmem:[%s6] sm:$0x1]
    %v816 = vlaneseq
    %v817 = vshrl.u32 %v816, 7
    %v818 = vsub.s32 0, %v817
    %v819 = vrot.slane %v814, %v818
    %v837 = vunpack.c.l.b16 %v798
    %v838 = vunpack.c.l.b16 %v799
    %v839 = vunpack.c.l.b16 %v800
    %v840 = vunpack.c.l.b16 %v801
    %v841 = vunpack.c.l.b16 %v802
    %v842 = vunpack.c.l.b16 %v803
    %v843 = vunpack.c.l.b16 %v804
    %v844 = vunpack.c.l.b16 %v805
    %v845 = vunpack.c.l.b16 %v806
    %v846 = vunpack.c.l.b16 %v807
    %v847 = vunpack.c.l.b16 %v808
    %v848 = vunpack.c.l.b16 %v809
    %v849 = vunpack.c.l.b16 %v810
    %v850 = vunpack.c.l.b16 %v811
    %v851 = vunpack.c.l.b16 %v812
    %v852 = vunpack.c.l.b16 %v813
    %v853 = vpack.c.b16 %v838, %v837
    %v854 = vpack.c.b16 %v840, %v839
    %v855 = vpack.c.b16 %v842, %v841
    %v856 = vpack.c.b16 %v844, %v843
    %v857 = vpack.c.b16 %v846, %v845
    %v858 = vpack.c.b16 %v848, %v847
    %v859 = vpack.c.b16 %v850, %v849
    %v860 = vpack.c.b16 %v852, %v851
    %869 = vmatprep.subr.bf16.mxu0 0
    %870 = vmatpush1.bf16.msra.mxu0 %v860
    %871 = vmatprep.subr.bf16.mxu0 0
    %872 = vmatpush1.bf16.msra.mxu0 %v859
    %873 = vmatprep.subr.bf16.mxu0 0
    %874 = vmatpush1.bf16.msra.mxu0 %v858
    %875 = vmatprep.subr.bf16.mxu0 0
    %876 = vmatpush1.bf16.msra.mxu0 %v857
    %877 = vmatprep.subr.bf16.mxu0 0
    %878 = vmatpush1.bf16.msra.mxu0 %v856
    %879 = vmatprep.subr.bf16.mxu0 0
    %880 = vmatpush1.bf16.msra.mxu0 %v855
    %881 = vmatprep.subr.bf16.mxu0 0
    %882 = vmatpush1.bf16.msra.mxu0 %v854
    %883 = vmatprep.subr.bf16.mxu0 0
    %884 = vmatpush1.bf16.msra.mxu0 %v853
    %885 = vmatprep.subr.bf16.mxu0 0
    %886 = vmatpush2.bf16.msra.mxu0 0
    %887 = vmatprep.subr.bf16.mxu0 0
    %888 = vmatpush2.bf16.msra.mxu0 0
    %889 = vmatprep.subr.bf16.mxu0 0
    %890 = vmatpush2.bf16.msra.mxu0 0
    %891 = vmatprep.subr.bf16.mxu0 0
    %892 = vmatpush2.bf16.msra.mxu0 0
    %893 = vmatprep.subr.bf16.mxu0 0
    %894 = vmatpush2.bf16.msra.mxu0 0
    %895 = vmatprep.subr.bf16.mxu0 0
    %896 = vmatpush2.bf16.msra.mxu0 0
    %897 = vmatprep.subr.bf16.mxu0 0
    %898 = vmatpush2.bf16.msra.mxu0 0
    %899 = vmatprep.subr.bf16.mxu0 0
    %900 = vmatpush2.bf16.msra.mxu0 0
    %901 = vmatprep.mubr.bf16.mxu0 0
    %902 = vmatmul.mubr.bf16.gmra.mxu0 %v797
    %v903 = vpop.f32.mrf.mxu0
    %v904 = vadd.f32 %v819, %v903
    %v905 = vpop.f32.mrf.mxu0
    %v906 = vpop.f32.mrf.mxu0
    %v907 = vpop.f32.mrf.mxu0
    %908 = vdwg.mxu0
    %909 = vst [vmem:[#allocation10] sm:$0xff] %v904
    // Predicated region
    $region46: #{tpu_custom_call.1} parent=1 // pred_check
      _
    $region47: #{tpu_custom_call.1} parent=1 // pred_check_branch
      %911 = sbr.rel (0) target = $region49
    $region48: #{tpu_custom_call.1} parent=1 // pred_region
      %s913 = ssub.s32 128, 64
      %914 = vsyncadd [#allocation4], %s913
      %s915 = sshll.u32 [#allocation10], 4
      %s916 = int_to_ptr.vmem [resolvable:$true] %s915
      %921 = dma.vmem_to_hbm [thread:$0]  %s916, 64, %s7, [#allocation4], 64, 64, 4
    $region49: #{tpu_custom_call.1} parent=1 // pred_fallthru
      _
    // Predicated region
    $region50: #{tpu_custom_call.1} parent=1 // pred_check
      _
    $region51: #{tpu_custom_call.1} parent=1 // pred_check_branch
      %923 = sbr.rel (0) target = $region53
    $region52: #{tpu_custom_call.1} parent=1 // pred_region
      %924 = dma.done [#allocation4], 128
    $region53: #{tpu_custom_call.1} parent=1 // pred_fallthru
      _
    %925 = vsyncpa [#allocation3], 1
    %926 = vsyncpa [#allocation6], 1
    %927 = vsyncpa [#allocation9], 1
    %928 = vsyncpa [#allocation4], 1

</llo_original>
